<compile_context>
chip_gen: v5e
topology: v5e:2x2
jax: 0.10.0
libtpu: 0.0.40
codegen_flags: <defaults>
</compile_context>

<pallas_src>
import functools

import jax
import jax.numpy as jnp
from jax.experimental import pallas as pl
from jax.experimental.pallas import tpu as pltpu

EPS = 1e-8


def _oks_kernel(ip_ref, tp_ref, w_ref, area_ref, out_ref):
    # ip_ref / tp_ref : (3, K_pad, BN)  -- planes are (x, y, v)
    # w_ref           : (K_pad, 1)      -- per-keypoint weights (sublane column)
    # area_ref        : (1, BN)         -- per-pose area (lane row)
    # out_ref         : (1, BN)         -- per-pose OKS (lane-dense output)
    ix = ip_ref[0]
    iy = ip_ref[1]
    tx = tp_ref[0]
    ty = tp_ref[1]
    tv = tp_ref[2]                      # visibility, (K_pad, BN)
    w = w_ref[...]                      # (K_pad, 1)
    area = area_ref[...]                # (1, BN)

    dx = ix - tx
    dy = iy - ty
    d2 = dx * dx + dy * dy              # (K_pad, BN), pure VPU

    # Same op order as the reference: 2 * area * w**2 + EPS, broadcast over
    # (sublane=keypoint) x (lane=pose).
    denom = 2.0 * area * (w * w) + EPS  # (K_pad, BN)
    oks_kp = jnp.exp(-(d2 / denom)) * tv

    num = jnp.sum(oks_kp, axis=0, keepdims=True)   # (1, BN)
    den = jnp.sum(tv, axis=0, keepdims=True)       # (1, BN)
    out_ref[...] = num / (den + EPS)


def _round_up(x, m):
    return ((x + m - 1) // m) * m


@functools.partial(jax.jit, static_argnames=("block_n",))
def oks_batched(input_poses, target_poses, weights, areas, *, block_n=256):
    """Batched OKS.

    input_poses / target_poses : (N, K, 3) float
    weights                    : (K,) float
    areas                      : scalar or (N,) float
    returns                    : (N,) float32 OKS values (one per pose pair)
    """
    N, K, _ = input_poses.shape
    k_pad = max(8, _round_up(K, 8))
    num_blocks = pl.cdiv(N, block_n)
    n_pad = num_blocks * block_n

    def to_planes(p):
        p = jnp.transpose(p.astype(jnp.float32), (2, 1, 0))        # (3, K, N)
        return jnp.pad(p, ((0, 0), (0, k_pad - K), (0, n_pad - N)))

    ip = to_planes(input_poses)
    tp = to_planes(target_poses)
    w = jnp.pad(weights.astype(jnp.float32), (0, k_pad - K)).reshape(k_pad, 1)
    a = jnp.broadcast_to(jnp.asarray(areas, jnp.float32).reshape(-1), (N,))
    a = jnp.pad(a, (0, n_pad - N), constant_values=1.0).reshape(1, n_pad)

    out = pl.pallas_call(
        _oks_kernel,
        out_shape=jax.ShapeDtypeStruct((1, n_pad), jnp.float32),
        grid=(num_blocks,),
        in_specs=[
            pl.BlockSpec((3, k_pad, block_n), lambda i: (0, 0, i)),  # input planes
            pl.BlockSpec((3, k_pad, block_n), lambda i: (0, 0, i)),  # target planes
            pl.BlockSpec((k_pad, 1), lambda i: (0, 0)),              # weights
            pl.BlockSpec((1, block_n), lambda i: (0, i)),            # areas
        ],
        out_specs=pl.BlockSpec((1, block_n), lambda i: (0, i)),
        compiler_params=pltpu.CompilerParams(
            dimension_semantics=("parallel",)),
    )(ip, tp, w, a)
    return out[0, :N]


def oks(input_pose, target_pose, weights, areas):
    """Single-pose forward matching the PyTorch Oks module exactly:
    (K, 3), (K, 3), scalar area -> scalar OKS."""
    # TODO(synk): for a truly single 17-keypoint pair the plain jnp expression
    # (XLA-fused) is cheaper than any kernel dispatch; kept here for API parity.
    out = oks_batched(
        input_pose[None], target_pose[None], weights,
        jnp.asarray(areas, jnp.float32).reshape(1), block_n=128)
    return out[0]


def _oks_ref(input_poses, target_poses, weights, areas):
    """Pure-JAX reference matching the PyTorch forward, vectorized over N."""
    tv = target_poses[..., 2]                                         # (N, K)
    d = jnp.sum((input_poses[..., :2] - target_poses[..., :2]) ** 2, -1)
    d = d / (2.0 * areas[:, None] * weights[None, :] ** 2 + EPS)
    return jnp.sum(jnp.exp(-d) * tv, -1) / (jnp.sum(tv, -1) + EPS)


if __name__ == "__main__":
    # Small deterministic batch of COCO-style 17-keypoint pose pairs.
    N, K = 512, 17
    key = jax.random.PRNGKey(0)
    k1, k2, k3, k4 = jax.random.split(key, 4)

    input_poses = jax.random.uniform(k1, (N, K, 3), jnp.float32)
    target_poses = jax.random.uniform(k2, (N, K, 3), jnp.float32)
    vis = (jax.random.uniform(k3, (N, K)) > 0.3).astype(jnp.float32)
    target_poses = target_poses.at[..., 2].set(vis)
    weights = jnp.linspace(0.025, 0.107, K, dtype=jnp.float32)
    areas = jax.random.uniform(k4, (N,), jnp.float32, 0.2, 1.0)

    # Batched kernel (2 grid steps of 256 poses each).
    out = jax.block_until_ready(
        oks_batched(input_poses, target_poses, weights, areas, block_n=256))
    ref = _oks_ref(input_poses, target_poses, weights, areas)
    assert out.shape == (N,)
    assert jnp.allclose(out, ref, rtol=1e-5, atol=1e-6), (
        float(jnp.max(jnp.abs(out - ref))))

    # Single-pose path (module-equivalent forward).
    out1 = jax.block_until_ready(
        oks(input_poses[0], target_poses[0], weights, areas[0]))
    assert jnp.allclose(out1, ref[0], rtol=1e-5, atol=1e-6), (
        float(out1), float(ref[0]))

    print("KERNEL_OK")
</pallas_src>

<mosaic_0001>
module attributes {stable_mosaic.version = 11 : i64} {
  func.func @_oks_kernel(%arg0: i32, %arg1: memref<3x24x256xf32, #tpu.memory_space<vmem>>, %arg2: memref<3x24x256xf32, #tpu.memory_space<vmem>>, %arg3: memref<24x1xf32, #tpu.memory_space<vmem>>, %arg4: memref<1x256xf32, #tpu.memory_space<vmem>>, %arg5: memref<1x256xf32, #tpu.memory_space<vmem>>) attributes {dimension_semantics = [#tpu.dimension_semantics<parallel>], iteration_bounds = array<i64: 2>, scalar_prefetch = 0 : i64, scratch_operands = 0 : i64, tpu.core_type = #tpu.core_type<tc>, window_params = [{transform_indices = @transform_0, window_bounds = array<i64: 3, 24, 256>}, {transform_indices = @transform_1, window_bounds = array<i64: 3, 24, 256>}, {pipeline_mode = #tpu.pipeline_mode<synchronous>, transform_indices = @transform_2, window_bounds = array<i64: 24, 1>}, {transform_indices = @transform_3, window_bounds = array<i64: 1, 256>}, {transform_indices = @transform_4, window_bounds = array<i64: 1, 256>}]} {
    %c0 = arith.constant 0 : index
    %c0_0 = arith.constant 0 : index
    %c0_1 = arith.constant 0 : index
    %0 = vector.load %arg1[%c0, %c0_0, %c0_1] : memref<3x24x256xf32, #tpu.memory_space<vmem>>, vector<1x24x256xf32>
    %1 = vector.shape_cast %0 : vector<1x24x256xf32> to vector<24x256xf32>
    %c1 = arith.constant 1 : index
    %c0_2 = arith.constant 0 : index
    %c0_3 = arith.constant 0 : index
    %2 = vector.load %arg1[%c1, %c0_2, %c0_3] : memref<3x24x256xf32, #tpu.memory_space<vmem>>, vector<1x24x256xf32>
    %3 = vector.shape_cast %2 : vector<1x24x256xf32> to vector<24x256xf32>
    %c0_4 = arith.constant 0 : index
    %c0_5 = arith.constant 0 : index
    %c0_6 = arith.constant 0 : index
    %4 = vector.load %arg2[%c0_4, %c0_5, %c0_6] : memref<3x24x256xf32, #tpu.memory_space<vmem>>, vector<1x24x256xf32>
    %5 = vector.shape_cast %4 : vector<1x24x256xf32> to vector<24x256xf32>
    %c1_7 = arith.constant 1 : index
    %c0_8 = arith.constant 0 : index
    %c0_9 = arith.constant 0 : index
    %6 = vector.load %arg2[%c1_7, %c0_8, %c0_9] : memref<3x24x256xf32, #tpu.memory_space<vmem>>, vector<1x24x256xf32>
    %7 = vector.shape_cast %6 : vector<1x24x256xf32> to vector<24x256xf32>
    %c2 = arith.constant 2 : index
    %c0_10 = arith.constant 0 : index
    %c0_11 = arith.constant 0 : index
    %8 = vector.load %arg2[%c2, %c0_10, %c0_11] : memref<3x24x256xf32, #tpu.memory_space<vmem>>, vector<1x24x256xf32>
    %9 = vector.shape_cast %8 : vector<1x24x256xf32> to vector<24x256xf32>
    %c0_12 = arith.constant 0 : index
    %c0_13 = arith.constant 0 : index
    %10 = vector.load %arg3[%c0_12, %c0_13] : memref<24x1xf32, #tpu.memory_space<vmem>>, vector<24x1xf32>
    %c0_14 = arith.constant 0 : index
    %c0_15 = arith.constant 0 : index
    %11 = vector.load %arg4[%c0_14, %c0_15] : memref<1x256xf32, #tpu.memory_space<vmem>>, vector<1x256xf32>
    %12 = arith.subf %1, %5 : vector<24x256xf32>
    %13 = arith.subf %3, %7 : vector<24x256xf32>
    %14 = arith.mulf %12, %12 : vector<24x256xf32>
    %15 = arith.mulf %13, %13 : vector<24x256xf32>
    %16 = arith.addf %14, %15 : vector<24x256xf32>
    %cst = arith.constant 2.000000e+00 : f32
    %17 = vector.broadcast %cst : f32 to vector<1x256xf32>
    %18 = arith.mulf %17, %11 : vector<1x256xf32>
    %19 = arith.mulf %10, %10 : vector<24x1xf32>
    %20 = vector.broadcast %18 : vector<1x256xf32> to vector<24x256xf32>
    %21 = vector.broadcast %19 : vector<24x1xf32> to vector<24x256xf32>
    %22 = arith.mulf %20, %21 : vector<24x256xf32>
    %cst_16 = arith.constant 9.99999993E-9 : f32
    %23 = vector.broadcast %cst_16 : f32 to vector<24x256xf32>
    %24 = arith.addf %22, %23 : vector<24x256xf32>
    %25 = arith.divf %16, %24 : vector<24x256xf32>
    %cst_17 = arith.constant 0.000000e+00 : f32
    %26 = vector.broadcast %cst_17 : f32 to vector<24x256xf32>
    %27 = arith.subf %26, %25 : vector<24x256xf32>
    %28 = math.exp %27 : vector<24x256xf32>
    %29 = arith.mulf %28, %9 : vector<24x256xf32>
    %cst_18 = arith.constant dense<0.000000e+00> : vector<256xf32>
    %30 = vector.multi_reduction <add>, %29, %cst_18 [0] : vector<24x256xf32> to vector<256xf32>
    %31 = vector.shape_cast %30 : vector<256xf32> to vector<1x256xf32>
    %cst_19 = arith.constant dense<0.000000e+00> : vector<256xf32>
    %32 = vector.multi_reduction <add>, %9, %cst_19 [0] : vector<24x256xf32> to vector<256xf32>
    %33 = vector.shape_cast %32 : vector<256xf32> to vector<1x256xf32>
    %cst_20 = arith.constant 9.99999993E-9 : f32
    %34 = vector.broadcast %cst_20 : f32 to vector<1x256xf32>
    %35 = arith.addf %33, %34 : vector<1x256xf32>
    %36 = arith.divf %31, %35 : vector<1x256xf32>
    %c0_21 = arith.constant 0 : index
    %c0_22 = arith.constant 0 : index
    %37 = vector.load %arg5[%c0_21, %c0_22] : memref<1x256xf32, #tpu.memory_space<vmem>>, vector<1x256xf32>
    tpu.vector_store %arg5[%c0_21, %c0_22], %36 {strides = array<i32>} : memref<1x256xf32, #tpu.memory_space<vmem>>, vector<1x256xf32>,
    return
  }
  func.func @transform_0(%arg0: i32) -> (i32, i32, i32) {
    %c0_i32 = arith.constant 0 : i32
    %c0_i32_0 = arith.constant 0 : i32
    %c0_i32_1 = arith.constant 0 : i32
    return %c0_i32, %c0_i32_0, %arg0 : i32, i32, i32
  }
  func.func @transform_1(%arg0: i32) -> (i32, i32, i32) {
    %c0_i32 = arith.constant 0 : i32
    %c0_i32_0 = arith.constant 0 : i32
    %c0_i32_1 = arith.constant 0 : i32
    return %c0_i32, %c0_i32_0, %arg0 : i32, i32, i32
  }
  func.func @transform_2(%arg0: i32) -> (i32, i32) {
    %c0_i32 = arith.constant 0 : i32
    %c0_i32_0 = arith.constant 0 : i32
    %c0_i32_1 = arith.constant 0 : i32
    return %c0_i32, %c0_i32_0 : i32, i32
  }
  func.func @transform_3(%arg0: i32) -> (i32, i32) {
    %c0_i32 = arith.constant 0 : i32
    %c0_i32_0 = arith.constant 0 : i32
    return %c0_i32, %arg0 : i32, i32
  }
  func.func @transform_4(%arg0: i32) -> (i32, i32) {
    %c0_i32 = arith.constant 0 : i32
    %c0_i32_0 = arith.constant 0 : i32
    return %c0_i32, %arg0 : i32, i32
  }
}

</mosaic_0001>

<llo_original>
// kernel: oks_batched.1
$region0: #{oks_batched.1}
  #allocation0 [shape = 'u32[]', space=smem, size = 0x4, offset = 0x4, fixed_abs, tag = 'smem constant byte address 0x4 - core index']
  #allocation1 [shape = 'u32[72,128]{1,0:T(1,128)}', space=vmem, size = 0x9000, scoped, tag = 'internal scratch']
  %s0 = inlined_call_operand.vmem [shape: f32[3,24,512], index: 0, kind: input, shape index: {}]
  %s1 = inlined_call_operand.vmem [shape: f32[3,24,512], index: 1, kind: input, shape index: {}]
  %s2 = inlined_call_operand.vmem [shape: f32[24,1], index: 2, kind: input, shape index: {}]
  %s3 = inlined_call_operand.vmem [shape: f32[1,512], index: 3, kind: input, shape index: {}]
  %s4 = inlined_call_operand.hbm [shape: f32[1,512], index: 4, kind: output, shape index: {}]
  %s5 = sld [smem:[#allocation0]]
  $region95: #{oks_batched.1} parent=0
    _
  %s7 = ssub.s32 1, %s5
  %s8 = scalar_select 0, %s7, %s5
  $region1: #{oks_batched.1} parent=0
    #allocation2 [shape = 'u8[147456]{0}', space=vmem, size = 0x24000, scoped, tag = 'input window, operand 0']
    #allocation3 [shape = 'u8[147456]{0}', space=vmem, size = 0x24000, scoped, tag = 'input window, operand 1']
    #allocation4 [shape = 'u8[2048]{0}', space=vmem, size = 0x800, scoped, tag = 'output window, operand 0']
    #allocation5 [shape = 's32[2]{0}', space=sflag, size = 0x8, scoped, tag = 'scoped memory for oks_batched.1']
    %9 = vsyncpa [#allocation5], 0
    %s10 = scalar_lea.sflag [#allocation5], 1
    %11 = vsyncpa %s10, 0
    loop: start=0, step=1, limit=4
    $region2: #{oks_batched.1} parent=1 // loop_pre_header
      _
    $region3: #{oks_batched.1} parent=1 // loop_header
      %s13 = sphi 0, %s17
      %p14 = scmp.ge.s32.totalorder %s13, 4
      %s23 = sphi 0, %s25
      %s26 = sphi 0, %s23
      %s27 = sphi 0, %s26
      %s43 = sphi 0, %s27
      %s49 = sphi 0, %s51
      %s52 = sphi 0, %s49
      %s53 = sphi 0, %s52
      %s69 = sphi 0, %s53
      %s73 = sphi 0, %s73
      %s75 = sphi 0, %s73
      %s76 = sphi 0, %s75
      %s90 = sphi 0, %s76
      %s96 = sphi 0, %s98
      %s99 = sphi 0, %s96
      %s100 = sphi 0, %s99
      %s116 = sphi 0, %s100
      %s122 = sphi 0, %s124
      %s125 = sphi 0, %s122
      %s126 = sphi 0, %s125
      %s142 = sphi 0, %s126
    $region4: #{oks_batched.1} parent=1 // loop_header_branch
      %16 = sbr.rel (%p14) target = $region8
    $region5: #{oks_batched.1} parent=1 // loop_body
      %s18 = ssub.s32 %s13, 1
      %s19 = ssub.s32 %s13, 2
      %s20 = sadd.s32 %s13, 1
      %s21 = ssub.s32 %s13, %s20
      %p22 = scmp.eq.s32.totalorder %s21, 0
      %s24 = sadd.s32 %s23, 1
      %s25 = scalar_select %p22, %s23, %s24
      %p28 = pneg %p22
      %p29 = scmp.eq.s32.totalorder %s13, 1
      %p30 = por %p28, %p29
      %p31 = scmp.ne.s32.totalorder %s23, %s26
      %p32 = scmp.eq.s32.totalorder %s13, 0
      %p33 = por %p31, %p32
      %p34 = scmp.ne.s32.totalorder %s23, %s26
      %p35 = scmp.eq.s32.totalorder %s18, 1
      %p36 = por %p34, %p35
      %p37 = scmp.ne.s32.totalorder %s26, %s27
      %p38 = scmp.eq.s32.totalorder %s18, 0
      %p39 = por %p37, %p38
      %p40 = scmp.ne.s32.totalorder %s26, %s27
      %p41 = scmp.eq.s32.totalorder %s19, 1
      %p42 = por %p40, %p41
      %p44 = scmp.ne.s32.totalorder %s27, %s43
      %p45 = scmp.eq.s32.totalorder %s19, 0
      %p46 = por %p44, %p45
      %s47 = ssub.s32 %s13, %s20
      %p48 = scmp.eq.s32.totalorder %s47, 0
      %s50 = sadd.s32 %s49, 1
      %s51 = scalar_select %p48, %s49, %s50
      %p54 = pneg %p48
      %p55 = scmp.eq.s32.totalorder %s13, 1
      %p56 = por %p54, %p55
      %p57 = scmp.ne.s32.totalorder %s49, %s52
      %p58 = scmp.eq.s32.totalorder %s13, 0
      %p59 = por %p57, %p58
      %p60 = scmp.ne.s32.totalorder %s49, %s52
      %p61 = scmp.eq.s32.totalorder %s18, 1
      %p62 = por %p60, %p61
      %p63 = scmp.ne.s32.totalorder %s52, %s53
      %p64 = scmp.eq.s32.totalorder %s18, 0
      %p65 = por %p63, %p64
      %p66 = scmp.ne.s32.totalorder %s52, %s53
      %p67 = scmp.eq.s32.totalorder %s19, 1
      %p68 = por %p66, %p67
      %p70 = scmp.ne.s32.totalorder %s53, %s69
      %p71 = scmp.eq.s32.totalorder %s19, 0
      %p72 = por %p70, %p71
      %s74 = sadd.s32 %s73, 1
      %p77 = scmp.eq.s32.totalorder %s13, 1
      %p78 = scmp.ne.s32.totalorder %s73, %s75
      %p79 = scmp.eq.s32.totalorder %s13, 0
      %p80 = por %p78, %p79
      %p81 = scmp.ne.s32.totalorder %s73, %s75
      %p82 = scmp.eq.s32.totalorder %s18, 1
      %p83 = por %p81, %p82
      %p84 = scmp.ne.s32.totalorder %s75, %s76
      %p85 = scmp.eq.s32.totalorder %s18, 0
      %p86 = por %p84, %p85
      %p87 = scmp.ne.s32.totalorder %s75, %s76
      %p88 = scmp.eq.s32.totalorder %s19, 1
      %p89 = por %p87, %p88
      %p91 = scmp.ne.s32.totalorder %s76, %s90
      %p92 = scmp.eq.s32.totalorder %s19, 0
      %p93 = por %p91, %p92
      %s94 = ssub.s32 %s13, %s20
      %p95 = scmp.eq.s32.totalorder %s94, 0
      %s97 = sadd.s32 %s96, 1
      %s98 = scalar_select %p95, %s96, %s97
      %p101 = pneg %p95
      %p102 = scmp.eq.s32.totalorder %s13, 1
      %p103 = por %p101, %p102
      %p104 = scmp.ne.s32.totalorder %s96, %s99
      %p105 = scmp.eq.s32.totalorder %s13, 0
      %p106 = por %p104, %p105
      %p107 = scmp.ne.s32.totalorder %s96, %s99
      %p108 = scmp.eq.s32.totalorder %s18, 1
      %p109 = por %p107, %p108
      %p110 = scmp.ne.s32.totalorder %s99, %s100
      %p111 = scmp.eq.s32.totalorder %s18, 0
      %p112 = por %p110, %p111
      %p113 = scmp.ne.s32.totalorder %s99, %s100
      %p114 = scmp.eq.s32.totalorder %s19, 1
      %p115 = por %p113, %p114
      %p117 = scmp.ne.s32.totalorder %s100, %s116
      %p118 = scmp.eq.s32.totalorder %s19, 0
      %p119 = por %p117, %p118
      %s120 = ssub.s32 %s13, %s20
      %p121 = scmp.eq.s32.totalorder %s120, 0
      %s123 = sadd.s32 %s122, 1
      %s124 = scalar_select %p121, %s122, %s123
      %p127 = pneg %p121
      %p128 = scmp.eq.s32.totalorder %s13, 1
      %p129 = por %p127, %p128
      %p130 = scmp.ne.s32.totalorder %s122, %s125
      %p131 = scmp.eq.s32.totalorder %s13, 0
      %p132 = por %p130, %p131
      %p133 = scmp.ne.s32.totalorder %s122, %s125
      %p134 = scmp.eq.s32.totalorder %s18, 1
      %p135 = por %p133, %p134
      %p136 = scmp.ne.s32.totalorder %s125, %s126
      %p137 = scmp.eq.s32.totalorder %s18, 0
      %p138 = por %p136, %p137
      %p139 = scmp.ne.s32.totalorder %s125, %s126
      %p140 = scmp.eq.s32.totalorder %s19, 1
      %p141 = por %p139, %p140
      %p143 = scmp.ne.s32.totalorder %s126, %s142
      %p144 = scmp.eq.s32.totalorder %s19, 0
      %p145 = por %p143, %p144
      %p146 = scmp.le.s32.totalorder 1, %s13
      %p147 = scmp.lt.s32.totalorder %s13, 3
      %p148 = pnand %p146, %p147
      %p149 = pneg %p148
      // Predicated region
      $region9: #{oks_batched.1} parent=5 // pred_check
        _
      $region10: #{oks_batched.1} parent=5 // pred_check_branch
        %151 = sbr.rel (%p148) target = $region12
      $region11: #{oks_batched.1} parent=5 // pred_region
        %s152 = ssub.s32 %s13, 1
        // Predicated region
        $region13: #{oks_batched.1} parent=11 // pred_check
          %p153 = pneg %p86
        $region14: #{oks_batched.1} parent=11 // pred_check_branch
          %155 = sbr.rel (%p153) target = $region16
        $region15: #{oks_batched.1} parent=11 // pred_region
          _
        $region16: #{oks_batched.1} parent=11 // pred_fallthru
          _
      $region12: #{oks_batched.1} parent=5 // pred_fallthru
        _
      %p156 = scmp.lt.s32.totalorder %s13, 2
      // Predicated region
      $region17: #{oks_batched.1} parent=5 // pred_check
        %p157 = pneg %p156
      $region18: #{oks_batched.1} parent=5 // pred_check_branch
        %159 = sbr.rel (%p157) target = $region20
      $region19: #{oks_batched.1} parent=5 // pred_region
        // Predicated region
        $region21: #{oks_batched.1} parent=19 // pred_check
          %p160 = pneg %p33
        $region22: #{oks_batched.1} parent=19 // pred_check_branch
          %162 = sbr.rel (%p160) target = $region24
        $region23: #{oks_batched.1} parent=19 // pred_region
          %s163 = sand.u32 %s23, 1
          %s164 = sand.u32 %s23, 1
          %s165 = smul.addr %s164, 144
          %s166 = scalar_lea.vmem [#allocation2], %s165
          %s167 = smul.u32 2, %s13
          %s168 = smul.addr %s167, 8
          %s169 = scalar_lea.vmem %s0, %s168
          // Predicated region
          $region25: #{oks_batched.1} parent=23 // pred_check
            _
          $region26: #{oks_batched.1} parent=23 // pred_check_branch
            %171 = sbr.rel (0) target = $region28
          $region27: #{oks_batched.1} parent=23 // pred_region
            // Predicated region
            $region29: #{oks_batched.1} parent=27 // pred_check
              _
            $region30: #{oks_batched.1} parent=27 // pred_check_branch
              %173 = sbr.rel (0) target = $region32
            $region31: #{oks_batched.1} parent=27 // pred_region
              loop: start=0, step=1, limit=1
              $region33: #{oks_batched.1} parent=31 // loop_pre_header
                _
              $region34: #{oks_batched.1} parent=31 // loop_header
                %s175 = sphi 0, %s179
                %p176 = scmp.ge.s32.totalorder %s175, 1
                %s180 = sphi %s169, %s169
                %s181 = sphi %s166, %s166
              $region35: #{oks_batched.1} parent=31 // loop_header_branch
                %178 = sbr.rel (%p176) target = $region39
              $region36: #{oks_batched.1} parent=31 // loop_body
                %v182 = vld [vmem:[%s180] sm:$0xff]
                %183 = vst [vmem:[%s181] sm:$0xff] %v182
                %v184 = vld [vmem:[%s180 + $0x8] sm:$0xff]
                %185 = vst [vmem:[%s181 + $0x8] sm:$0xff] %v184
                %v186 = vld [vmem:[%s180 + $0x20] sm:$0xff]
                %187 = vst [vmem:[%s181 + $0x10] sm:$0xff] %v186
                %v188 = vld [vmem:[%s180 + $0x28] sm:$0xff]
                %189 = vst [vmem:[%s181 + $0x18] sm:$0xff] %v188
                %v190 = vld [vmem:[%s180 + $0x40] sm:$0xff]
                %191 = vst [vmem:[%s181 + $0x20] sm:$0xff] %v190
                %v192 = vld [vmem:[%s180 + $0x48] sm:$0xff]
                %193 = vst [vmem:[%s181 + $0x28] sm:$0xff] %v192
                %v194 = vld [vmem:[%s180 + $0x60] sm:$0xff]
                %195 = vst [vmem:[%s181 + $0x30] sm:$0xff] %v194
                %v196 = vld [vmem:[%s180 + $0x68] sm:$0xff]
                %197 = vst [vmem:[%s181 + $0x38] sm:$0xff] %v196
                %v198 = vld [vmem:[%s180 + $0x80] sm:$0xff]
                %199 = vst [vmem:[%s181 + $0x40] sm:$0xff] %v198
                %v200 = vld [vmem:[%s180 + $0x88] sm:$0xff]
                %201 = vst [vmem:[%s181 + $0x48] sm:$0xff] %v200
                %v202 = vld [vmem:[%s180 + $0xa0] sm:$0xff]
                %203 = vst [vmem:[%s181 + $0x50] sm:$0xff] %v202
                %v204 = vld [vmem:[%s180 + $0xa8] sm:$0xff]
                %205 = vst [vmem:[%s181 + $0x58] sm:$0xff] %v204
                %v206 = vld [vmem:[%s180 + $0xc0] sm:$0xff]
                %207 = vst [vmem:[%s181 + $0x60] sm:$0xff] %v206
                %v208 = vld [vmem:[%s180 + $0xc8] sm:$0xff]
                %209 = vst [vmem:[%s181 + $0x68] sm:$0xff] %v208
                %v210 = vld [vmem:[%s180 + $0xe0] sm:$0xff]
                %211 = vst [vmem:[%s181 + $0x70] sm:$0xff] %v210
                %v212 = vld [vmem:[%s180 + $0xe8] sm:$0xff]
                %213 = vst [vmem:[%s181 + $0x78] sm:$0xff] %v212
                %v214 = vld [vmem:[%s180 + $0x100] sm:$0xff]
                %215 = vst [vmem:[%s181 + $0x80] sm:$0xff] %v214
                %v216 = vld [vmem:[%s180 + $0x108] sm:$0xff]
                %217 = vst [vmem:[%s181 + $0x88] sm:$0xff] %v216
              $region37: #{oks_batched.1} parent=31 // loop_footer
                %s179 = sadd.s32 1, %s175
              $region38: #{oks_batched.1} parent=31 // loop_footer_branch
                %174 = sbr.rel target = $region34
              $region39: #{oks_batched.1} parent=31 // loop_exit
                _
            $region32: #{oks_batched.1} parent=27 // pred_fallthru
              _
            // Predicated region
            $region40: #{oks_batched.1} parent=27 // pred_check
              _
            $region41: #{oks_batched.1} parent=27 // pred_check_branch
              %219 = sbr.rel target = $region43
            $region42: #{oks_batched.1} parent=27 // pred_region
              _
            $region43: #{oks_batched.1} parent=27 // pred_fallthru
              _
          $region28: #{oks_batched.1} parent=23 // pred_fallthru
            _
          %220 = vnop
        $region24: #{oks_batched.1} parent=19 // pred_fallthru
          _
        // Predicated region
        $region44: #{oks_batched.1} parent=19 // pred_check
          %p221 = pneg %p59
        $region45: #{oks_batched.1} parent=19 // pred_check_branch
          %223 = sbr.rel (%p221) target = $region47
        $region46: #{oks_batched.1} parent=19 // pred_region
          %s224 = sand.u32 %s49, 1
          %s225 = sand.u32 %s49, 1
          %s226 = smul.addr %s225, 144
          %s227 = scalar_lea.vmem [#allocation3], %s226
          %s228 = smul.u32 2, %s13
          %s229 = smul.addr %s228, 8
          %s230 = scalar_lea.vmem %s1, %s229
          // Predicated region
          $region48: #{oks_batched.1} parent=46 // pred_check
            _
          $region49: #{oks_batched.1} parent=46 // pred_check_branch
            %232 = sbr.rel (0) target = $region51
          $region50: #{oks_batched.1} parent=46 // pred_region
            // Predicated region
            $region52: #{oks_batched.1} parent=50 // pred_check
              _
            $region53: #{oks_batched.1} parent=50 // pred_check_branch
              %234 = sbr.rel (0) target = $region55
            $region54: #{oks_batched.1} parent=50 // pred_region
              loop: start=0, step=1, limit=1
              $region56: #{oks_batched.1} parent=54 // loop_pre_header
                _
              $region57: #{oks_batched.1} parent=54 // loop_header
                %s236 = sphi 0, %s240
                %p237 = scmp.ge.s32.totalorder %s236, 1
                %s241 = sphi %s230, %s230
                %s242 = sphi %s227, %s227
              $region58: #{oks_batched.1} parent=54 // loop_header_branch
                %239 = sbr.rel (%p237) target = $region62
              $region59: #{oks_batched.1} parent=54 // loop_body
                %v243 = vld [vmem:[%s241] sm:$0xff]
                %244 = vst [vmem:[%s242] sm:$0xff] %v243
                %v245 = vld [vmem:[%s241 + $0x8] sm:$0xff]
                %246 = vst [vmem:[%s242 + $0x8] sm:$0xff] %v245
                %v247 = vld [vmem:[%s241 + $0x20] sm:$0xff]
                %248 = vst [vmem:[%s242 + $0x10] sm:$0xff] %v247
                %v249 = vld [vmem:[%s241 + $0x28] sm:$0xff]
                %250 = vst [vmem:[%s242 + $0x18] sm:$0xff] %v249
                %v251 = vld [vmem:[%s241 + $0x40] sm:$0xff]
                %252 = vst [vmem:[%s242 + $0x20] sm:$0xff] %v251
                %v253 = vld [vmem:[%s241 + $0x48] sm:$0xff]
                %254 = vst [vmem:[%s242 + $0x28] sm:$0xff] %v253
                %v255 = vld [vmem:[%s241 + $0x60] sm:$0xff]
                %256 = vst [vmem:[%s242 + $0x30] sm:$0xff] %v255
                %v257 = vld [vmem:[%s241 + $0x68] sm:$0xff]
                %258 = vst [vmem:[%s242 + $0x38] sm:$0xff] %v257
                %v259 = vld [vmem:[%s241 + $0x80] sm:$0xff]
                %260 = vst [vmem:[%s242 + $0x40] sm:$0xff] %v259
                %v261 = vld [vmem:[%s241 + $0x88] sm:$0xff]
                %262 = vst [vmem:[%s242 + $0x48] sm:$0xff] %v261
                %v263 = vld [vmem:[%s241 + $0xa0] sm:$0xff]
                %264 = vst [vmem:[%s242 + $0x50] sm:$0xff] %v263
                %v265 = vld [vmem:[%s241 + $0xa8] sm:$0xff]
                %266 = vst [vmem:[%s242 + $0x58] sm:$0xff] %v265
                %v267 = vld [vmem:[%s241 + $0xc0] sm:$0xff]
                %268 = vst [vmem:[%s242 + $0x60] sm:$0xff] %v267
                %v269 = vld [vmem:[%s241 + $0xc8] sm:$0xff]
                %270 = vst [vmem:[%s242 + $0x68] sm:$0xff] %v269
                %v271 = vld [vmem:[%s241 + $0xe0] sm:$0xff]
                %272 = vst [vmem:[%s242 + $0x70] sm:$0xff] %v271
                %v273 = vld [vmem:[%s241 + $0xe8] sm:$0xff]
                %274 = vst [vmem:[%s242 + $0x78] sm:$0xff] %v273
                %v275 = vld [vmem:[%s241 + $0x100] sm:$0xff]
                %276 = vst [vmem:[%s242 + $0x80] sm:$0xff] %v275
                %v277 = vld [vmem:[%s241 + $0x108] sm:$0xff]
                %278 = vst [vmem:[%s242 + $0x88] sm:$0xff] %v277
              $region60: #{oks_batched.1} parent=54 // loop_footer
                %s240 = sadd.s32 1, %s236
              $region61: #{oks_batched.1} parent=54 // loop_footer_branch
                %235 = sbr.rel target = $region57
              $region62: #{oks_batched.1} parent=54 // loop_exit
                _
            $region55: #{oks_batched.1} parent=50 // pred_fallthru
              _
            // Predicated region
            $region63: #{oks_batched.1} parent=50 // pred_check
              _
            $region64: #{oks_batched.1} parent=50 // pred_check_branch
              %280 = sbr.rel target = $region66
            $region65: #{oks_batched.1} parent=50 // pred_region
              _
            $region66: #{oks_batched.1} parent=50 // pred_fallthru
              _
          $region51: #{oks_batched.1} parent=46 // pred_fallthru
            _
          %281 = vnop
        $region47: #{oks_batched.1} parent=19 // pred_fallthru
          _
        // Predicated region
        $region67: #{oks_batched.1} parent=19 // pred_check
          %p282 = pneg %p106
        $region68: #{oks_batched.1} parent=19 // pred_check_branch
          %284 = sbr.rel (%p282) target = $region70
        $region69: #{oks_batched.1} parent=19 // pred_region
          %s285 = smul.u32 2, %s13
          %p286 = scmp.lt.s32.totalorder %s285, 3
          %s287 = scalar_select %p286, %s285, 3
          %s288 = scalar_lea.vmem %s3, %s287
          %s289 = smul.u32 2, %s13
        $region70: #{oks_batched.1} parent=19 // pred_fallthru
          _
      $region20: #{oks_batched.1} parent=5 // pred_fallthru
        _
      %p290 = scmp.le.s32.totalorder 1, %s13
      %p291 = scmp.lt.s32.totalorder %s13, 3
      %p292 = pnand %p290, %p291
      %p293 = pneg %p292
      // Predicated region
      $region71: #{oks_batched.1} parent=5 // pred_check
        _
      $region72: #{oks_batched.1} parent=5 // pred_check_branch
        %295 = sbr.rel (%p292) target = $region74
      $region73: #{oks_batched.1} parent=5 // pred_region
        %s296 = ssub.s32 %s13, 1
        %s297 = sand.u32 %s26, 1
        %s298 = sand.u32 %s26, 1
        %s299 = smul.addr %s298, 144
        %s300 = scalar_lea.vmem [#allocation2], %s299
        // Predicated region
        $region75: #{oks_batched.1} parent=73 // pred_check
          %p301 = pneg %p39
        $region76: #{oks_batched.1} parent=73 // pred_check_branch
          %303 = sbr.rel (%p301) target = $region78
        $region77: #{oks_batched.1} parent=73 // pred_region
          _
        $region78: #{oks_batched.1} parent=73 // pred_fallthru
          _
        %s304 = sand.u32 %s52, 1
        %s305 = sand.u32 %s52, 1
        %s306 = smul.addr %s305, 144
        %s307 = scalar_lea.vmem [#allocation3], %s306
        // Predicated region
        $region79: #{oks_batched.1} parent=73 // pred_check
          %p308 = pneg %p65
        $region80: #{oks_batched.1} parent=73 // pred_check_branch
          %310 = sbr.rel (%p308) target = $region82
        $region81: #{oks_batched.1} parent=73 // pred_region
          _
        $region82: #{oks_batched.1} parent=73 // pred_fallthru
          _
        %s311 = sand.u32 %s26, 1
        %s312 = sand.u32 %s26, 1
        %s313 = smul.addr %s312, 144
        %s314 = scalar_lea.vmem [#allocation2], %s313
        %p315 = pneg %p39
        %p316 = pneg %p36
        %s317 = sand.u32 %s52, 1
        %s318 = sand.u32 %s52, 1
        %s319 = smul.addr %s318, 144
        %s320 = scalar_lea.vmem [#allocation3], %s319
        %p321 = pneg %p65
        %p322 = pneg %p62
        %p323 = pneg %p86
        %p324 = pneg %p83
        %s325 = smul.u32 2, %s18
        %p326 = scmp.lt.s32.totalorder %s325, 3
        %s327 = scalar_select %p326, %s325, 3
        %s328 = scalar_lea.vmem %s3, %s327
        %p329 = pneg %p112
        %p330 = pneg %p109
        %p331 = pneg %p138
        %p332 = pneg %p135
        %s333 = sand.u32 %s125, 1
        %s334 = scalar_lea.sflag [#allocation5], %s333
        %s335 = sand.u32 %s125, 1
        %s336 = smul.addr %s335, 2
        %s337 = scalar_lea.vmem [#allocation4], %s336
        %s338 = smul.u32 2, %s18
        %s339 = smul.u32 2, %s18
        %s340 = smul.u32 2, %s18
        %p341 = scmp.lt.s32.totalorder %s340, 3
        %s342 = scalar_select %p341, %s340, 3
        %s343 = scalar_lea.vmem %s3, %s342
        %s344 = smul.u32 2, %s18
        %s345 = smul.u32 2, %s18
        %v346 = vld [vmem:[%s300] sm:$0xff]
        %v347 = vld [vmem:[%s300 + $0x8] sm:$0xff]
        %v348 = vld [vmem:[%s300 + $0x10] sm:$0xff]
        %v349 = vld [vmem:[%s300 + $0x18] sm:$0xff]
        %v350 = vld [vmem:[%s300 + $0x20] sm:$0xff]
        %v351 = vld [vmem:[%s300 + $0x28] sm:$0xff]
        %s352 = scalar_lea.vmem %s300, 48 [#allocation2]
        %v353 = vld [vmem:[%s352] sm:$0xff]
        %v354 = vld [vmem:[%s352 + $0x8] sm:$0xff]
        %v355 = vld [vmem:[%s352 + $0x10] sm:$0xff]
        %v356 = vld [vmem:[%s352 + $0x18] sm:$0xff]
        %v357 = vld [vmem:[%s352 + $0x20] sm:$0xff]
        %v358 = vld [vmem:[%s352 + $0x28] sm:$0xff]
        %v359 = vld [vmem:[%s307] sm:$0xff]
        %v360 = vld [vmem:[%s307 + $0x8] sm:$0xff]
        %v361 = vld [vmem:[%s307 + $0x10] sm:$0xff]
        %v362 = vld [vmem:[%s307 + $0x18] sm:$0xff]
        %v363 = vld [vmem:[%s307 + $0x20] sm:$0xff]
        %v364 = vld [vmem:[%s307 + $0x28] sm:$0xff]
        %s365 = scalar_lea.vmem %s307, 48 [#allocation3]
        %v366 = vld [vmem:[%s365] sm:$0xff]
        %v367 = vld [vmem:[%s365 + $0x8] sm:$0xff]
        %v368 = vld [vmem:[%s365 + $0x10] sm:$0xff]
        %v369 = vld [vmem:[%s365 + $0x18] sm:$0xff]
        %v370 = vld [vmem:[%s365 + $0x20] sm:$0xff]
        %v371 = vld [vmem:[%s365 + $0x28] sm:$0xff]
        %s372 = scalar_lea.vmem %s307, 96 [#allocation3]
        %v373 = vld [vmem:[%s372] sm:$0xff]
        %v374 = vld [vmem:[%s372 + $0x8] sm:$0xff]
        %v375 = vld [vmem:[%s372 + $0x10] sm:$0xff]
        %v376 = vld [vmem:[%s372 + $0x18] sm:$0xff]
        %v377 = vld [vmem:[%s372 + $0x20] sm:$0xff]
        %v378 = vld [vmem:[%s372 + $0x28] sm:$0xff]
        %v379 = vld [vmem:[%s2] sm:$0xff]
        %v380 = vld [vmem:[%s2 + $0x8] sm:$0xff]
        %v381 = vld [vmem:[%s2 + $0x10] sm:$0xff]
        %v382 = vld [vmem:[%s343] sm:$0x3]
        %v383 = vsub.f32 %v346, %v359
        %v384 = vsub.f32 %v347, %v360
        %v385 = vsub.f32 %v348, %v361
        %v386 = vsub.f32 %v349, %v362
        %v387 = vsub.f32 %v350, %v363
        %v388 = vsub.f32 %v351, %v364
        %v389 = vsub.f32 %v353, %v366
        %v390 = vsub.f32 %v354, %v367
        %v391 = vsub.f32 %v355, %v368
        %v392 = vsub.f32 %v356, %v369
        %v393 = vsub.f32 %v357, %v370
        %v394 = vsub.f32 %v358, %v371
        %v395 = vmul.f32 %v383, %v383
        %v396 = vmul.f32 %v384, %v384
        %v397 = vmul.f32 %v385, %v385
        %v398 = vmul.f32 %v386, %v386
        %v399 = vmul.f32 %v387, %v387
        %v400 = vmul.f32 %v388, %v388
        %v401 = vmul.f32 %v389, %v389
        %v402 = vmul.f32 %v390, %v390
        %v403 = vmul.f32 %v391, %v391
        %v404 = vmul.f32 %v392, %v392
        %v405 = vmul.f32 %v393, %v393
        %v406 = vmul.f32 %v394, %v394
        %v407 = vadd.f32 %v395, %v401
        %v408 = vadd.f32 %v396, %v402
        %v409 = vadd.f32 %v397, %v403
        %v410 = vadd.f32 %v398, %v404
        %v411 = vadd.f32 %v399, %v405
        %v412 = vadd.f32 %v400, %v406
        %v413 = vmul.f32 %v382, 2.0
        %v414 = vmul.f32 %v379, %v379
        %v415 = vmul.f32 %v380, %v380
        %v416 = vmul.f32 %v381, %v381
        %v418 = vperm.slane %v413, 0
        %v419 = vperm.slane %v413, 1
        %423 = vset.pattern.permute.xlu0 0
        %424 = vperm.xlu0 %423, %v414
        %v425 = vpop.permute.xlu0 %424
        %428 = vset.pattern.permute.xlu0 0
        %429 = vperm.xlu0 %428, %v415
        %v430 = vpop.permute.xlu0 %429
        %433 = vset.pattern.permute.xlu0 0
        %434 = vperm.xlu0 %433, %v416
        %v435 = vpop.permute.xlu0 %434
        %v437 = vmul.f32 %v418, %v425
        %v438 = vmul.f32 %v419, %v425
        %v439 = vmul.f32 %v418, %v430
        %v440 = vmul.f32 %v419, %v430
        %v441 = vmul.f32 %v418, %v435
        %v442 = vmul.f32 %v419, %v435
        %v443 = vadd.f32 %v437, 1e-08
        %v444 = vadd.f32 %v438, 1e-08
        %v445 = vadd.f32 %v439, 1e-08
        %v446 = vadd.f32 %v440, 1e-08
        %v447 = vadd.f32 %v441, 1e-08
        %v448 = vadd.f32 %v442, 1e-08
        %v449 = vrcp.pop %v443
        %v450 = vmul.f32 %v443, %v449
        %v451 = vsub.f32 1.0, %v450
        %v452 = vmul.f32 %v449, %v451
        %v453 = vadd.f32 %v449, %v452
        %vm454 = vweird.f32 %v443
        %vm455 = vweird.f32 %v449
        %vm456 = vmor %vm454, %vm455
        %v457 = vsel %vm456, %v449, %v453
        %v458 = vand.u32 2147483647, %v443
        %vm459 = vcmp.eq.f32.partialorder %v458, 8.507059e+37
        %v460 = vand.u32 %v443, 2147483648
        %v461 = vor.u32 1.1754944e-38, %v460
        %v462 = vsel %vm459, %v461, %v457
        %v463 = vmul.f32 %v407, %v462
        %v464 = vrcp.pop %v444
        %v465 = vmul.f32 %v444, %v464
        %v466 = vsub.f32 1.0, %v465
        %v467 = vmul.f32 %v464, %v466
        %v468 = vadd.f32 %v464, %v467
        %vm469 = vweird.f32 %v444
        %vm470 = vweird.f32 %v464
        %vm471 = vmor %vm469, %vm470
        %v472 = vsel %vm471, %v464, %v468
        %v473 = vand.u32 2147483647, %v444
        %vm474 = vcmp.eq.f32.partialorder %v473, 8.507059e+37
        %v475 = vand.u32 %v444, 2147483648
        %v476 = vor.u32 1.1754944e-38, %v475
        %v477 = vsel %vm474, %v476, %v472
        %v478 = vmul.f32 %v408, %v477
        %v479 = vrcp.pop %v445
        %v480 = vmul.f32 %v445, %v479
        %v481 = vsub.f32 1.0, %v480
        %v482 = vmul.f32 %v479, %v481
        %v483 = vadd.f32 %v479, %v482
        %vm484 = vweird.f32 %v445
        %vm485 = vweird.f32 %v479
        %vm486 = vmor %vm484, %vm485
        %v487 = vsel %vm486, %v479, %v483
        %v488 = vand.u32 2147483647, %v445
        %vm489 = vcmp.eq.f32.partialorder %v488, 8.507059e+37
        %v490 = vand.u32 %v445, 2147483648
        %v491 = vor.u32 1.1754944e-38, %v490
        %v492 = vsel %vm489, %v491, %v487
        %v493 = vmul.f32 %v409, %v492
        %v494 = vrcp.pop %v446
        %v495 = vmul.f32 %v446, %v494
        %v496 = vsub.f32 1.0, %v495
        %v497 = vmul.f32 %v494, %v496
        %v498 = vadd.f32 %v494, %v497
        %vm499 = vweird.f32 %v446
        %vm500 = vweird.f32 %v494
        %vm501 = vmor %vm499, %vm500
        %v502 = vsel %vm501, %v494, %v498
        %v503 = vand.u32 2147483647, %v446
        %vm504 = vcmp.eq.f32.partialorder %v503, 8.507059e+37
        %v505 = vand.u32 %v446, 2147483648
        %v506 = vor.u32 1.1754944e-38, %v505
        %v507 = vsel %vm504, %v506, %v502
        %v508 = vmul.f32 %v410, %v507
        %v509 = vrcp.pop %v447
        %v510 = vmul.f32 %v447, %v509
        %v511 = vsub.f32 1.0, %v510
        %v512 = vmul.f32 %v509, %v511
        %v513 = vadd.f32 %v509, %v512
        %vm514 = vweird.f32 %v447
        %vm515 = vweird.f32 %v509
        %vm516 = vmor %vm514, %vm515
        %v517 = vsel %vm516, %v509, %v513
        %v518 = vand.u32 2147483647, %v447
        %vm519 = vcmp.eq.f32.partialorder %v518, 8.507059e+37
        %v520 = vand.u32 %v447, 2147483648
        %v521 = vor.u32 1.1754944e-38, %v520
        %v522 = vsel %vm519, %v521, %v517
        %v523 = vmul.f32 %v411, %v522
        %v524 = vrcp.pop %v448
        %v525 = vmul.f32 %v448, %v524
        %v526 = vsub.f32 1.0, %v525
        %v527 = vmul.f32 %v524, %v526
        %v528 = vadd.f32 %v524, %v527
        %vm529 = vweird.f32 %v448
        %vm530 = vweird.f32 %v524
        %vm531 = vmor %vm529, %vm530
        %v532 = vsel %vm531, %v524, %v528
        %v533 = vand.u32 2147483647, %v448
        %vm534 = vcmp.eq.f32.partialorder %v533, 8.507059e+37
        %v535 = vand.u32 %v448, 2147483648
        %v536 = vor.u32 1.1754944e-38, %v535
        %v537 = vsel %vm534, %v536, %v532
        %v538 = vmul.f32 %v412, %v537
        %v539 = vsub.f32 0.0, %v463
        %v540 = vsub.f32 0.0, %v478
        %v541 = vsub.f32 0.0, %v493
        %v542 = vsub.f32 0.0, %v508
        %v543 = vsub.f32 0.0, %v523
        %v544 = vsub.f32 0.0, %v538
        %v545 = vmul.f32 %v539, 1.442695
        %v546 = vpow.pop %v545
        %v547 = vmul.f32 %v540, 1.442695
        %v548 = vpow.pop %v547
        %v549 = vmul.f32 %v541, 1.442695
        %v550 = vpow.pop %v549
        %v551 = vmul.f32 %v542, 1.442695
        %v552 = vpow.pop %v551
        %v553 = vmul.f32 %v543, 1.442695
        %v554 = vpow.pop %v553
        %v555 = vmul.f32 %v544, 1.442695
        %v556 = vpow.pop %v555
        %v557 = vmul.f32 %v546, %v373
        %v558 = vmul.f32 %v548, %v374
        %v559 = vmul.f32 %v550, %v375
        %v560 = vmul.f32 %v552, %v376
        %v561 = vmul.f32 %v554, %v377
        %v562 = vmul.f32 %v556, %v378
        %v563 = vadd.f32 %v557, %v559
        %v564 = vadd.f32 %v563, %v561
        %v565 = vrot.slane %v564, 4
        %v566 = vadd.f32 %v564, %v565
        %v567 = vrot.slane %v566, 2
        %v568 = vadd.f32 %v566, %v567
        %v569 = vrot.slane %v568, 1
        %v570 = vadd.f32 %v568, %v569
        %v571 = vadd.f32 %v558, %v560
        %v572 = vadd.f32 %v571, %v562
        %v573 = vrot.slane %v572, 4
        %v574 = vadd.f32 %v572, %v573
        %v575 = vrot.slane %v574, 2
        %v576 = vadd.f32 %v574, %v575
        %v577 = vrot.slane %v576, 1
        %v578 = vadd.f32 %v576, %v577
        %v579 = vadd.f32 %v373, %v375
        %v580 = vadd.f32 %v579, %v377
        %v581 = vrot.slane %v580, 4
        %v582 = vadd.f32 %v580, %v581
        %v583 = vrot.slane %v582, 2
        %v584 = vadd.f32 %v582, %v583
        %v585 = vrot.slane %v584, 1
        %v586 = vadd.f32 %v584, %v585
        %v587 = vadd.f32 %v374, %v376
        %v588 = vadd.f32 %v587, %v378
        %v589 = vrot.slane %v588, 4
        %v590 = vadd.f32 %v588, %v589
        %v591 = vrot.slane %v590, 2
        %v592 = vadd.f32 %v590, %v591
        %v593 = vrot.slane %v592, 1
        %v594 = vadd.f32 %v592, %v593
        %v595 = vadd.f32 %v586, 1e-08
        %v596 = vadd.f32 %v594, 1e-08
        %v597 = vrcp.pop %v595
        %v598 = vmul.f32 %v595, %v597
        %v599 = vsub.f32 1.0, %v598
        %v600 = vmul.f32 %v597, %v599
        %v601 = vadd.f32 %v597, %v600
        %vm602 = vweird.f32 %v595
        %vm603 = vweird.f32 %v597
        %vm604 = vmor %vm602, %vm603
        %v605 = vsel %vm604, %v597, %v601
        %v606 = vand.u32 2147483647, %v595
        %vm607 = vcmp.eq.f32.partialorder %v606, 8.507059e+37
        %v608 = vand.u32 %v595, 2147483648
        %v609 = vor.u32 1.1754944e-38, %v608
        %v610 = vsel %vm607, %v609, %v605
        %v611 = vmul.f32 %v570, %v610
        %v612 = vrcp.pop %v596
        %v613 = vmul.f32 %v596, %v612
        %v614 = vsub.f32 1.0, %v613
        %v615 = vmul.f32 %v612, %v614
        %v616 = vadd.f32 %v612, %v615
        %vm617 = vweird.f32 %v596
        %vm618 = vweird.f32 %v612
        %vm619 = vmor %vm617, %vm618
        %v620 = vsel %vm619, %v612, %v616
        %v621 = vand.u32 2147483647, %v596
        %vm622 = vcmp.eq.f32.partialorder %v621, 8.507059e+37
        %v623 = vand.u32 %v596, 2147483648
        %v624 = vor.u32 1.1754944e-38, %v623
        %v625 = vsel %vm622, %v624, %v620
        %v626 = vmul.f32 %v578, %v625
        %v629 = vrot.slane %v626, 7
        %vm630 = vcmask 1040384
        %v631 = vsel %vm630, %v611, %v629
        %v633 = vlaneseq
        %vm634 = vcmp.ge.s32.totalorder %v633, 0
        %vm635 = vcmp.lt.s32.totalorder %v633, 256
        %vm636 = vmand %vm634, %vm635
        %637 = vst.msk [vmem:[%s337] sm:$0x3] %vm636, %v631
        %s638 = sand.u32 %s125, 1
        %s639 = scalar_lea.sflag [#allocation5], %s638
        %s640 = sand.u32 %s125, 1
        %s641 = smul.addr %s640, 2
        %s642 = scalar_lea.vmem [#allocation4], %s641
        // Predicated region
        $region83: #{oks_batched.1} parent=73 // pred_check
          %p643 = pneg %p135
        $region84: #{oks_batched.1} parent=73 // pred_check_branch
          %645 = sbr.rel (%p643) target = $region86
        $region85: #{oks_batched.1} parent=73 // pred_region
          %s646 = smul.u32 2, %s18
          %648 = vsyncadd %s639, 0
          %s649 = scalar_lea.hbm %s4, %s646
          %s651 = sshll.u32 %s642, 4
          %s652 = int_to_ptr.vmem [resolvable:$true] %s651
          %s653 = sshll.u32 %s649, 4
          %s654 = int_to_ptr.hbm [resolvable:$true] %s653
          %656 = dma.vmem_to_hbm [thread:$0]  %s652, 32, %s654, %s639
        $region86: #{oks_batched.1} parent=73 // pred_fallthru
          _
      $region74: #{oks_batched.1} parent=5 // pred_fallthru
        _
      %p657 = scmp.le.s32.totalorder 2, %s13
      // Predicated region
      $region87: #{oks_batched.1} parent=5 // pred_check
        %p658 = pneg %p657
      $region88: #{oks_batched.1} parent=5 // pred_check_branch
        %660 = sbr.rel (%p658) target = $region90
      $region89: #{oks_batched.1} parent=5 // pred_region
        %s661 = ssub.s32 %s13, 2
        // Predicated region
        $region91: #{oks_batched.1} parent=89 // pred_check
          %p662 = pneg %p141
        $region92: #{oks_batched.1} parent=89 // pred_check_branch
          %664 = sbr.rel (%p662) target = $region94
        $region93: #{oks_batched.1} parent=89 // pred_region
          %s665 = sand.u32 %s126, 1
          %s666 = scalar_lea.sflag [#allocation5], %s665
          %s667 = sand.u32 %s126, 1
          %s668 = smul.addr %s667, 2
          %s669 = scalar_lea.vmem [#allocation4], %s668
          %671 = dma.done %s666, 32
        $region94: #{oks_batched.1} parent=89 // pred_fallthru
          _
      $region90: #{oks_batched.1} parent=5 // pred_fallthru
        _
    $region6: #{oks_batched.1} parent=1 // loop_footer
      %s17 = sadd.s32 1, %s13
    $region7: #{oks_batched.1} parent=1 // loop_footer_branch
      %12 = sbr.rel target = $region3
    $region8: #{oks_batched.1} parent=1 // loop_exit
      _
    %672 = vsyncpa [#allocation5], 1
    %s673 = scalar_lea.sflag [#allocation5], 1
    %674 = vsyncpa %s673, 1

</llo_original>
